<compile_context>
chip_gen: v6e
topology: v6e:2x2x1
jax: 0.10.0
libtpu: 0.0.40
codegen_flags: <defaults>
</compile_context>

<pallas_src>
import functools

import jax
import jax.numpy as jnp
from jax.experimental import pallas as pl
from jax.experimental.pallas import tpu as pltpu


def _round_up(n, m):
    return ((n + m - 1) // m) * m


def _choose_tb(n_lanes, max_tb):
    """Batch (lane) tile: multiple of 128; >=2 grid steps for larger batches so the
    "parallel" batch axis can shard across both TensorCores on v7x."""
    b128 = _round_up(max(int(n_lanes), 1), 128)
    if b128 <= 256:
        return b128                        # launch-bound regime: single step
    tb = _round_up(-(-b128 // 2), 128)     # split batch across >= 2 grid steps
    return min(tb, max_tb)


def _vpu_matmul(a, b):
    """a: (M, K), b: (K, N) with tiny static K -> unrolled broadcast-FMA (VPU only)."""
    k_dim = a.shape[1]
    acc = a[:, 0:1] * b[0:1, :]
    for k in range(1, k_dim):
        acc = acc + a[:, k:k + 1] * b[k:k + 1, :]
    return acc


def _policy_kernel(xt_ref, p_ref, out_ref):
    # xt : (S, TB)                      feature-major input tile (f32 or bf16)
    # p  : (H + A, max(S, H) + 1)       packed [w1 | b1] over [w2 | b2], grid-invariant
    # out: (A, TB)                      softmax probabilities, feature-major
    S = xt_ref.shape[0]
    A = out_ref.shape[0]
    H = p_ref.shape[0] - A

    xt = xt_ref[...].astype(jnp.float32)          # bf16 inputs upcast here
    p = p_ref[...].astype(jnp.float32)
    w1 = p[:H, :S]                                # (H, S)
    b1 = p[:H, S:S + 1]                           # (H, 1)
    w2 = p[H:H + A, :H]                           # (A, H)
    b2 = p[H:H + A, H:H + 1]                      # (A, 1)

    # fc1 + ReLU   (feature-major: h^T = relu(W1 @ x^T + b1))
    h = jnp.maximum(_vpu_matmul(w1, xt) + b1, 0.0)        # (H, TB)
    # fc2
    logits = _vpu_matmul(w2, h) + b2                      # (A, TB)

    # softmax over the action axis (sublane axis here == dim=1 of the (B, A) view)
    m = jnp.max(logits, axis=0, keepdims=True)            # (1, TB)
    e = jnp.exp(logits - m)
    denom = jnp.sum(e, axis=0, keepdims=True)             # (1, TB)
    inv = pl.reciprocal(denom, approx=True)               # EUP slot
    inv = inv * (2.0 - denom * inv)                       # one Newton step -> ~f32 accuracy
    out_ref[...] = (e * inv).astype(out_ref.dtype)


def pack_params(w1, b1, w2, b2):
    """Pack torch-layout params into one small lane-aligned grid-invariant buffer.

    Layout (rows x cols) = (H + A, max(S, H) + 1):
      [:H , :S]  = w1      [:H , S]  = b1
      [H: , :H]  = w2      [H: , H]  = b2
    """
    h_size, s_size = w1.shape
    a_size = w2.shape[0]
    cols = max(s_size, h_size) + 1
    p = jnp.zeros((h_size + a_size, cols), jnp.float32)
    p = p.at[:h_size, :s_size].set(w1.astype(jnp.float32))
    p = p.at[:h_size, s_size].set(jnp.ravel(b1).astype(jnp.float32))
    p = p.at[h_size:, :h_size].set(w2.astype(jnp.float32))
    p = p.at[h_size:, h_size].set(jnp.ravel(b2).astype(jnp.float32))
    return p


@functools.partial(jax.jit, static_argnames=("a_size", "max_block_b"))
def policy_forward_fm(xt, packed_params, *, a_size, max_block_b=16384):
    """Feature-major hot path.

    xt: (S, B) observations with batch on the lane axis (f32 or bf16).
    packed_params: output of `pack_params` (f32).
    Returns softmax probabilities of shape (A, B), f32.
    """
    S, B = xt.shape
    A = a_size
    H = packed_params.shape[0] - A

    # Only tiny batches (launch-bound anyway) get lane-padded; for B >= 256 the
    # last grid step is a standard partial boundary block -> no extra HBM pass.
    lanes = B if B >= 256 else _round_up(max(B, 1), 128)
    if lanes != B:
        xt = jnp.pad(xt, ((0, 0), (0, lanes - B)))

    tb = _choose_tb(lanes, max_block_b)
    grid = (pl.cdiv(lanes, tb),)

    vmem = pltpu.MemorySpace.VMEM
    cost = pl.CostEstimate(
        flops=2 * (S * H + H * A) * lanes,
        transcendentals=(A + 1) * lanes,              # exp per action + reciprocal
        bytes_accessed=(S * xt.dtype.itemsize + A * 4) * lanes
        + packed_params.size * packed_params.dtype.itemsize,
    )

    out_t = pl.pallas_call(
        _policy_kernel,
        out_shape=jax.ShapeDtypeStruct((A, lanes), jnp.float32),
        grid_spec=pltpu.PrefetchScalarGridSpec(
            num_scalar_prefetch=0,
            grid=grid,
            in_specs=[
                pl.BlockSpec((S, tb), lambda i: (0, i), memory_space=vmem),   # x^T tile
                pl.BlockSpec(packed_params.shape, lambda i: (0, 0),
                             memory_space=vmem),                              # packed params
            ],
            out_specs=pl.BlockSpec((A, tb), lambda i: (0, i), memory_space=vmem),
        ),
        compiler_params=pltpu.CompilerParams(
            dimension_semantics=("parallel",),   # batch axis shards across TCs on v7x
        ),
        cost_estimate=cost,
    )(xt, packed_params)

    if lanes != B:
        out_t = out_t[:, :B]
    return out_t


@functools.partial(jax.jit, static_argnames=("a_size", "max_block_b"))
def policy_forward(x, packed_params, *, a_size, max_block_b=16384):
    """Original-module interface: x (B, S) -> probs (B, A).

    Layout plumbing only; for batched rollouts prefer `policy_forward_fm` with a
    feature-major (S, B) observation buffer to avoid the transpose HBM passes.
    """
    return policy_forward_fm(x.T, packed_params, a_size=a_size,
                             max_block_b=max_block_b).T


def init_params(key, s_size, h_size, a_size):
    """PyTorch-style uniform(-1/sqrt(fan_in), 1/sqrt(fan_in)) init, torch (out, in) layout."""
    k1, k2, k3, k4 = jax.random.split(key, 4)
    bound1 = 1.0 / jnp.sqrt(s_size)
    bound2 = 1.0 / jnp.sqrt(h_size)
    w1 = jax.random.uniform(k1, (h_size, s_size), jnp.float32, -bound1, bound1)
    b1 = jax.random.uniform(k2, (h_size, 1), jnp.float32, -bound1, bound1)
    w2 = jax.random.uniform(k3, (a_size, h_size), jnp.float32, -bound2, bound2)
    b2 = jax.random.uniform(k4, (a_size, 1), jnp.float32, -bound2, bound2)
    return w1, b1, w2, b2


if __name__ == "__main__":
    # CartPole-v1: observation dim = 4, action dim = 2; small hidden size.
    s_size, a_size, h_size = 4, 2, 16

    key = jax.random.PRNGKey(0)
    k_x, k_xb, k_p = jax.random.split(key, 3)
    w1, b1, w2, b2 = init_params(k_p, s_size, h_size, a_size)
    packed = pack_params(w1, b1, w2, b2)

    def reference(x):
        h = jnp.maximum(x @ w1.T + b1[:, 0], 0.0)
        return jax.nn.softmax(h @ w2.T + b2[:, 0], axis=1)

    # 1) Tiny batch through the module-compatible (B, S) -> (B, A) interface.
    x_small = jax.random.normal(k_x, (2, s_size), jnp.float32)
    probs_small = jax.block_until_ready(policy_forward(x_small, packed, a_size=a_size))
    assert probs_small.shape == (2, a_size)
    assert jnp.allclose(probs_small, reference(x_small), atol=1e-5, rtol=1e-5)
    assert jnp.allclose(jnp.sum(probs_small, axis=1), 1.0, atol=1e-5)

    # 2) Batched-rollout hot path: feature-major (S, B) in, (A, B) out.
    #    (In a real rollout the observation buffer is kept feature-major; the
    #    transpose below only builds the test input.  B=1000 exercises the
    #    multi-step parallel grid and the partial boundary block.)
    B = 1000
    x_big = jax.random.normal(k_xb, (B, s_size), jnp.float32)
    xt_big = x_big.T                                   # (S, B)
    probs_fm = jax.block_until_ready(policy_forward_fm(xt_big, packed, a_size=a_size))
    assert probs_fm.shape == (a_size, B)
    ref_big = reference(x_big)
    assert jnp.allclose(probs_fm.T, ref_big, atol=1e-5, rtol=1e-5)
    assert jnp.allclose(jnp.sum(probs_fm, axis=0), 1.0, atol=1e-5)

    # 3) bfloat16 input streaming (halves the dominant HBM stream on v6e/v7x).
    probs_bf16 = jax.block_until_ready(
        policy_forward_fm(xt_big.astype(jnp.bfloat16), packed, a_size=a_size))
    assert probs_bf16.shape == (a_size, B)
    assert jnp.allclose(probs_bf16.T, ref_big, atol=2e-2, rtol=2e-2)

    print("KERNEL_OK")
</pallas_src>

<mosaic_0001>
module attributes {stable_mosaic.version = 11 : i64} {
  func.func @_policy_kernel(%arg0: i32, %arg1: memref<4x128xf32, #tpu.memory_space<vmem>>, %arg2: memref<18x17xf32, #tpu.memory_space<vmem>>, %arg3: memref<2x128xf32, #tpu.memory_space<vmem>>) attributes {dimension_semantics = [#tpu.dimension_semantics<parallel>], iteration_bounds = array<i64: 1>, scalar_prefetch = 0 : i64, scratch_operands = 0 : i64, tpu.core_type = #tpu.core_type<tc>, window_params = [{transform_indices = @transform_0, window_bounds = array<i64: 4, 128>}, {pipeline_mode = #tpu.pipeline_mode<synchronous>, transform_indices = @transform_1, window_bounds = array<i64: 18, 17>}, {transform_indices = @transform_2, window_bounds = array<i64: 2, 128>}]} {
    %c0 = arith.constant 0 : index
    %c0_0 = arith.constant 0 : index
    %0 = vector.load %arg1[%c0, %c0_0] : memref<4x128xf32, #tpu.memory_space<vmem>>, vector<4x128xf32>
    %c0_1 = arith.constant 0 : index
    %c0_2 = arith.constant 0 : index
    %1 = vector.load %arg2[%c0_1, %c0_2] : memref<18x17xf32, #tpu.memory_space<vmem>>, vector<18x17xf32>
    %2 = vector.extract_strided_slice %1 {offsets = [0, 0], sizes = [16, 4], strides = [1, 1]} : vector<18x17xf32> to vector<16x4xf32>
    %3 = vector.extract_strided_slice %1 {offsets = [0, 4], sizes = [16, 1], strides = [1, 1]} : vector<18x17xf32> to vector<16x1xf32>
    %4 = vector.extract_strided_slice %1 {offsets = [16, 0], sizes = [2, 16], strides = [1, 1]} : vector<18x17xf32> to vector<2x16xf32>
    %5 = vector.extract_strided_slice %1 {offsets = [16, 16], sizes = [2, 1], strides = [1, 1]} : vector<18x17xf32> to vector<2x1xf32>
    %6 = vector.extract_strided_slice %2 {offsets = [0, 0], sizes = [16, 1], strides = [1, 1]} : vector<16x4xf32> to vector<16x1xf32>
    %7 = vector.extract_strided_slice %0 {offsets = [0, 0], sizes = [1, 128], strides = [1, 1]} : vector<4x128xf32> to vector<1x128xf32>
    %8 = vector.broadcast %6 : vector<16x1xf32> to vector<16x128xf32>
    %9 = vector.broadcast %7 : vector<1x128xf32> to vector<16x128xf32>
    %10 = arith.mulf %8, %9 : vector<16x128xf32>
    %11 = vector.extract_strided_slice %2 {offsets = [0, 1], sizes = [16, 1], strides = [1, 1]} : vector<16x4xf32> to vector<16x1xf32>
    %12 = vector.extract_strided_slice %0 {offsets = [1, 0], sizes = [1, 128], strides = [1, 1]} : vector<4x128xf32> to vector<1x128xf32>
    %13 = vector.broadcast %11 : vector<16x1xf32> to vector<16x128xf32>
    %14 = vector.broadcast %12 : vector<1x128xf32> to vector<16x128xf32>
    %15 = arith.mulf %13, %14 : vector<16x128xf32>
    %16 = arith.addf %10, %15 : vector<16x128xf32>
    %17 = vector.extract_strided_slice %2 {offsets = [0, 2], sizes = [16, 1], strides = [1, 1]} : vector<16x4xf32> to vector<16x1xf32>
    %18 = vector.extract_strided_slice %0 {offsets = [2, 0], sizes = [1, 128], strides = [1, 1]} : vector<4x128xf32> to vector<1x128xf32>
    %19 = vector.broadcast %17 : vector<16x1xf32> to vector<16x128xf32>
    %20 = vector.broadcast %18 : vector<1x128xf32> to vector<16x128xf32>
    %21 = arith.mulf %19, %20 : vector<16x128xf32>
    %22 = arith.addf %16, %21 : vector<16x128xf32>
    %23 = vector.extract_strided_slice %2 {offsets = [0, 3], sizes = [16, 1], strides = [1, 1]} : vector<16x4xf32> to vector<16x1xf32>
    %24 = vector.extract_strided_slice %0 {offsets = [3, 0], sizes = [1, 128], strides = [1, 1]} : vector<4x128xf32> to vector<1x128xf32>
    %25 = vector.broadcast %23 : vector<16x1xf32> to vector<16x128xf32>
    %26 = vector.broadcast %24 : vector<1x128xf32> to vector<16x128xf32>
    %27 = arith.mulf %25, %26 : vector<16x128xf32>
    %28 = arith.addf %22, %27 : vector<16x128xf32>
    %29 = vector.broadcast %3 : vector<16x1xf32> to vector<16x128xf32>
    %30 = arith.addf %28, %29 : vector<16x128xf32>
    %cst = arith.constant 0.000000e+00 : f32
    %31 = vector.broadcast %cst : f32 to vector<16x128xf32>
    %32 = arith.maximumf %30, %31 : vector<16x128xf32>
    %33 = vector.extract_strided_slice %4 {offsets = [0, 0], sizes = [2, 1], strides = [1, 1]} : vector<2x16xf32> to vector<2x1xf32>
    %34 = vector.extract_strided_slice %32 {offsets = [0, 0], sizes = [1, 128], strides = [1, 1]} : vector<16x128xf32> to vector<1x128xf32>
    %35 = vector.broadcast %33 : vector<2x1xf32> to vector<2x128xf32>
    %36 = vector.broadcast %34 : vector<1x128xf32> to vector<2x128xf32>
    %37 = arith.mulf %35, %36 : vector<2x128xf32>
    %38 = vector.extract_strided_slice %4 {offsets = [0, 1], sizes = [2, 1], strides = [1, 1]} : vector<2x16xf32> to vector<2x1xf32>
    %39 = vector.extract_strided_slice %32 {offsets = [1, 0], sizes = [1, 128], strides = [1, 1]} : vector<16x128xf32> to vector<1x128xf32>
    %40 = vector.broadcast %38 : vector<2x1xf32> to vector<2x128xf32>
    %41 = vector.broadcast %39 : vector<1x128xf32> to vector<2x128xf32>
    %42 = arith.mulf %40, %41 : vector<2x128xf32>
    %43 = arith.addf %37, %42 : vector<2x128xf32>
    %44 = vector.extract_strided_slice %4 {offsets = [0, 2], sizes = [2, 1], strides = [1, 1]} : vector<2x16xf32> to vector<2x1xf32>
    %45 = vector.extract_strided_slice %32 {offsets = [2, 0], sizes = [1, 128], strides = [1, 1]} : vector<16x128xf32> to vector<1x128xf32>
    %46 = vector.broadcast %44 : vector<2x1xf32> to vector<2x128xf32>
    %47 = vector.broadcast %45 : vector<1x128xf32> to vector<2x128xf32>
    %48 = arith.mulf %46, %47 : vector<2x128xf32>
    %49 = arith.addf %43, %48 : vector<2x128xf32>
    %50 = vector.extract_strided_slice %4 {offsets = [0, 3], sizes = [2, 1], strides = [1, 1]} : vector<2x16xf32> to vector<2x1xf32>
    %51 = vector.extract_strided_slice %32 {offsets = [3, 0], sizes = [1, 128], strides = [1, 1]} : vector<16x128xf32> to vector<1x128xf32>
    %52 = vector.broadcast %50 : vector<2x1xf32> to vector<2x128xf32>
    %53 = vector.broadcast %51 : vector<1x128xf32> to vector<2x128xf32>
    %54 = arith.mulf %52, %53 : vector<2x128xf32>
    %55 = arith.addf %49, %54 : vector<2x128xf32>
    %56 = vector.extract_strided_slice %4 {offsets = [0, 4], sizes = [2, 1], strides = [1, 1]} : vector<2x16xf32> to vector<2x1xf32>
    %57 = vector.extract_strided_slice %32 {offsets = [4, 0], sizes = [1, 128], strides = [1, 1]} : vector<16x128xf32> to vector<1x128xf32>
    %58 = vector.broadcast %56 : vector<2x1xf32> to vector<2x128xf32>
    %59 = vector.broadcast %57 : vector<1x128xf32> to vector<2x128xf32>
    %60 = arith.mulf %58, %59 : vector<2x128xf32>
    %61 = arith.addf %55, %60 : vector<2x128xf32>
    %62 = vector.extract_strided_slice %4 {offsets = [0, 5], sizes = [2, 1], strides = [1, 1]} : vector<2x16xf32> to vector<2x1xf32>
    %63 = vector.extract_strided_slice %32 {offsets = [5, 0], sizes = [1, 128], strides = [1, 1]} : vector<16x128xf32> to vector<1x128xf32>
    %64 = vector.broadcast %62 : vector<2x1xf32> to vector<2x128xf32>
    %65 = vector.broadcast %63 : vector<1x128xf32> to vector<2x128xf32>
    %66 = arith.mulf %64, %65 : vector<2x128xf32>
    %67 = arith.addf %61, %66 : vector<2x128xf32>
    %68 = vector.extract_strided_slice %4 {offsets = [0, 6], sizes = [2, 1], strides = [1, 1]} : vector<2x16xf32> to vector<2x1xf32>
    %69 = vector.extract_strided_slice %32 {offsets = [6, 0], sizes = [1, 128], strides = [1, 1]} : vector<16x128xf32> to vector<1x128xf32>
    %70 = vector.broadcast %68 : vector<2x1xf32> to vector<2x128xf32>
    %71 = vector.broadcast %69 : vector<1x128xf32> to vector<2x128xf32>
    %72 = arith.mulf %70, %71 : vector<2x128xf32>
    %73 = arith.addf %67, %72 : vector<2x128xf32>
    %74 = vector.extract_strided_slice %4 {offsets = [0, 7], sizes = [2, 1], strides = [1, 1]} : vector<2x16xf32> to vector<2x1xf32>
    %75 = vector.extract_strided_slice %32 {offsets = [7, 0], sizes = [1, 128], strides = [1, 1]} : vector<16x128xf32> to vector<1x128xf32>
    %76 = vector.broadcast %74 : vector<2x1xf32> to vector<2x128xf32>
    %77 = vector.broadcast %75 : vector<1x128xf32> to vector<2x128xf32>
    %78 = arith.mulf %76, %77 : vector<2x128xf32>
    %79 = arith.addf %73, %78 : vector<2x128xf32>
    %80 = vector.extract_strided_slice %4 {offsets = [0, 8], sizes = [2, 1], strides = [1, 1]} : vector<2x16xf32> to vector<2x1xf32>
    %81 = vector.extract_strided_slice %32 {offsets = [8, 0], sizes = [1, 128], strides = [1, 1]} : vector<16x128xf32> to vector<1x128xf32>
    %82 = vector.broadcast %80 : vector<2x1xf32> to vector<2x128xf32>
    %83 = vector.broadcast %81 : vector<1x128xf32> to vector<2x128xf32>
    %84 = arith.mulf %82, %83 : vector<2x128xf32>
    %85 = arith.addf %79, %84 : vector<2x128xf32>
    %86 = vector.extract_strided_slice %4 {offsets = [0, 9], sizes = [2, 1], strides = [1, 1]} : vector<2x16xf32> to vector<2x1xf32>
    %87 = vector.extract_strided_slice %32 {offsets = [9, 0], sizes = [1, 128], strides = [1, 1]} : vector<16x128xf32> to vector<1x128xf32>
    %88 = vector.broadcast %86 : vector<2x1xf32> to vector<2x128xf32>
    %89 = vector.broadcast %87 : vector<1x128xf32> to vector<2x128xf32>
    %90 = arith.mulf %88, %89 : vector<2x128xf32>
    %91 = arith.addf %85, %90 : vector<2x128xf32>
    %92 = vector.extract_strided_slice %4 {offsets = [0, 10], sizes = [2, 1], strides = [1, 1]} : vector<2x16xf32> to vector<2x1xf32>
    %93 = vector.extract_strided_slice %32 {offsets = [10, 0], sizes = [1, 128], strides = [1, 1]} : vector<16x128xf32> to vector<1x128xf32>
    %94 = vector.broadcast %92 : vector<2x1xf32> to vector<2x128xf32>
    %95 = vector.broadcast %93 : vector<1x128xf32> to vector<2x128xf32>
    %96 = arith.mulf %94, %95 : vector<2x128xf32>
    %97 = arith.addf %91, %96 : vector<2x128xf32>
    %98 = vector.extract_strided_slice %4 {offsets = [0, 11], sizes = [2, 1], strides = [1, 1]} : vector<2x16xf32> to vector<2x1xf32>
    %99 = vector.extract_strided_slice %32 {offsets = [11, 0], sizes = [1, 128], strides = [1, 1]} : vector<16x128xf32> to vector<1x128xf32>
    %100 = vector.broadcast %98 : vector<2x1xf32> to vector<2x128xf32>
    %101 = vector.broadcast %99 : vector<1x128xf32> to vector<2x128xf32>
    %102 = arith.mulf %100, %101 : vector<2x128xf32>
    %103 = arith.addf %97, %102 : vector<2x128xf32>
    %104 = vector.extract_strided_slice %4 {offsets = [0, 12], sizes = [2, 1], strides = [1, 1]} : vector<2x16xf32> to vector<2x1xf32>
    %105 = vector.extract_strided_slice %32 {offsets = [12, 0], sizes = [1, 128], strides = [1, 1]} : vector<16x128xf32> to vector<1x128xf32>
    %106 = vector.broadcast %104 : vector<2x1xf32> to vector<2x128xf32>
    %107 = vector.broadcast %105 : vector<1x128xf32> to vector<2x128xf32>
    %108 = arith.mulf %106, %107 : vector<2x128xf32>
    %109 = arith.addf %103, %108 : vector<2x128xf32>
    %110 = vector.extract_strided_slice %4 {offsets = [0, 13], sizes = [2, 1], strides = [1, 1]} : vector<2x16xf32> to vector<2x1xf32>
    %111 = vector.extract_strided_slice %32 {offsets = [13, 0], sizes = [1, 128], strides = [1, 1]} : vector<16x128xf32> to vector<1x128xf32>
    %112 = vector.broadcast %110 : vector<2x1xf32> to vector<2x128xf32>
    %113 = vector.broadcast %111 : vector<1x128xf32> to vector<2x128xf32>
    %114 = arith.mulf %112, %113 : vector<2x128xf32>
    %115 = arith.addf %109, %114 : vector<2x128xf32>
    %116 = vector.extract_strided_slice %4 {offsets = [0, 14], sizes = [2, 1], strides = [1, 1]} : vector<2x16xf32> to vector<2x1xf32>
    %117 = vector.extract_strided_slice %32 {offsets = [14, 0], sizes = [1, 128], strides = [1, 1]} : vector<16x128xf32> to vector<1x128xf32>
    %118 = vector.broadcast %116 : vector<2x1xf32> to vector<2x128xf32>
    %119 = vector.broadcast %117 : vector<1x128xf32> to vector<2x128xf32>
    %120 = arith.mulf %118, %119 : vector<2x128xf32>
    %121 = arith.addf %115, %120 : vector<2x128xf32>
    %122 = vector.extract_strided_slice %4 {offsets = [0, 15], sizes = [2, 1], strides = [1, 1]} : vector<2x16xf32> to vector<2x1xf32>
    %123 = vector.extract_strided_slice %32 {offsets = [15, 0], sizes = [1, 128], strides = [1, 1]} : vector<16x128xf32> to vector<1x128xf32>
    %124 = vector.broadcast %122 : vector<2x1xf32> to vector<2x128xf32>
    %125 = vector.broadcast %123 : vector<1x128xf32> to vector<2x128xf32>
    %126 = arith.mulf %124, %125 : vector<2x128xf32>
    %127 = arith.addf %121, %126 : vector<2x128xf32>
    %128 = vector.broadcast %5 : vector<2x1xf32> to vector<2x128xf32>
    %129 = arith.addf %127, %128 : vector<2x128xf32>
    %cst_3 = arith.constant dense<0xFF800000> : vector<128xf32>
    %130 = vector.multi_reduction <maximumf>, %129, %cst_3 [0] : vector<2x128xf32> to vector<128xf32>
    %131 = vector.shape_cast %130 : vector<128xf32> to vector<1x128xf32>
    %132 = vector.broadcast %131 : vector<1x128xf32> to vector<2x128xf32>
    %133 = arith.subf %129, %132 : vector<2x128xf32>
    %134 = math.exp %133 : vector<2x128xf32>
    %cst_4 = arith.constant dense<0.000000e+00> : vector<128xf32>
    %135 = vector.multi_reduction <add>, %134, %cst_4 [0] : vector<2x128xf32> to vector<128xf32>
    %136 = vector.shape_cast %135 : vector<128xf32> to vector<1x128xf32>
    %137 = tpu.reciprocal %136 {approx = true} : vector<1x128xf32> -> vector<1x128xf32>
    %138 = arith.mulf %136, %137 : vector<1x128xf32>
    %cst_5 = arith.constant 2.000000e+00 : f32
    %139 = vector.broadcast %cst_5 : f32 to vector<1x128xf32>
    %140 = arith.subf %139, %138 : vector<1x128xf32>
    %141 = arith.mulf %137, %140 : vector<1x128xf32>
    %142 = vector.broadcast %141 : vector<1x128xf32> to vector<2x128xf32>
    %143 = arith.mulf %134, %142 : vector<2x128xf32>
    %c0_6 = arith.constant 0 : index
    %c0_7 = arith.constant 0 : index
    %144 = vector.load %arg3[%c0_6, %c0_7] : memref<2x128xf32, #tpu.memory_space<vmem>>, vector<2x128xf32>
    tpu.vector_store %arg3[%c0_6, %c0_7], %143 {strides = array<i32>} : memref<2x128xf32, #tpu.memory_space<vmem>>, vector<2x128xf32>,
    return
  }
  func.func @transform_0(%arg0: i32) -> (i32, i32) {
    %c0_i32 = arith.constant 0 : i32
    %c0_i32_0 = arith.constant 0 : i32
    return %c0_i32, %arg0 : i32, i32
  }
  func.func @transform_1(%arg0: i32) -> (i32, i32) {
    %c0_i32 = arith.constant 0 : i32
    %c0_i32_0 = arith.constant 0 : i32
    %c0_i32_1 = arith.constant 0 : i32
    return %c0_i32, %c0_i32_0 : i32, i32
  }
  func.func @transform_2(%arg0: i32) -> (i32, i32) {
    %c0_i32 = arith.constant 0 : i32
    %c0_i32_0 = arith.constant 0 : i32
    return %c0_i32, %arg0 : i32, i32
  }
}

</mosaic_0001>

<llo_original>
// kernel: policy_forward_fm.1
$region0: #{policy_forward_fm.1}
  #allocation0 [shape = 'u32[]', space=smem, size = 0x4, offset = 0x4, fixed_abs, tag = 'smem constant byte address 0x4 - core index']
  #allocation1 [shape = 'u32[144,128]{1,0:T(1,128)}', space=vmem, size = 0x12000, scoped, tag = 'internal scratch']
  %s0 = inlined_call_operand.vmem [shape: f32[4,128], index: 0, kind: input, shape index: {}]
  %s1 = inlined_call_operand.hbm [shape: f32[18,17], index: 1, kind: input, shape index: {}]
  %s2 = inlined_call_operand.hbm [shape: f32[2,128], index: 2, kind: output, shape index: {}]
  %s3 = sld [smem:[#allocation0]]
  $region22: #{policy_forward_fm.1} parent=0
    _
  %s5 = ssub.s32 1, %s3
  %s6 = scalar_select 0, %s5, %s3
  $region1: #{policy_forward_fm.1} parent=0
    #allocation2 [shape = 'u8[12288]{0}', space=vmem, size = 0x3000, scoped, tag = 'input window, operand 1, single buffered']
    #allocation3 [shape = 's32[1]{0}', space=sflag, size = 0x4, scoped, tag = 'scoped memory for policy_forward_fm.1']
    #allocation4 [shape = 's32[1]{0}', space=sflag, size = 0x4, scoped, tag = 'scoped memory for policy_forward_fm.1']
    #allocation5 [shape = 'u8[1024]{0}', space=vmem, size = 0x400, scoped, tag = 'output window, operand 0, single buffered']
    %7 = vsyncpa [#allocation3], 0
    %8 = vsyncpa [#allocation4], 0
    // Predicated region
    $region2: #{policy_forward_fm.1} parent=1 // pred_check
      _
    $region3: #{policy_forward_fm.1} parent=1 // pred_check_branch
      %10 = sbr.rel (0) target = $region5
    $region4: #{policy_forward_fm.1} parent=1 // pred_region
      _
    $region5: #{policy_forward_fm.1} parent=1 // pred_fallthru
      _
    // Predicated region
    $region6: #{policy_forward_fm.1} parent=1 // pred_check
      _
    $region7: #{policy_forward_fm.1} parent=1 // pred_check_branch
      %12 = sbr.rel (0) target = $region9
    $region8: #{policy_forward_fm.1} parent=1 // pred_region
      %s14 = ssub.s32 384, 384
      %15 = vsyncadd [#allocation3], %s14
      %s16 = sshll.u32 [#allocation2], 4
      %s17 = int_to_ptr.vmem [resolvable:$true] %s16
      %22 = dma.hbm_to_vmem [thread:$0]  %s1, 384, %s17, [#allocation3], 128, 128, 8
    $region9: #{policy_forward_fm.1} parent=1 // pred_fallthru
      _
    // Predicated region
    $region10: #{policy_forward_fm.1} parent=1 // pred_check
      _
    $region11: #{policy_forward_fm.1} parent=1 // pred_check_branch
      %24 = sbr.rel (0) target = $region13
    $region12: #{policy_forward_fm.1} parent=1 // pred_region
      %25 = dma.done [#allocation3], 384
    $region13: #{policy_forward_fm.1} parent=1 // pred_fallthru
      _
    %v26 = vld [vmem:[%s0] sm:$0xf]
    %v27 = vld [vmem:[#allocation2] sm:$0xff]
    %v28 = vld [vmem:[#allocation2 + $0x8] sm:$0xff]
    %v29 = vld [vmem:[#allocation2 + $0x10] sm:$0x3]
    %31 = vset.pattern.permute.xlu0 0
    %32 = vperm.xlu0 %31, %v27
    %v33 = vpop.permute.xlu0 %32
    %36 = vset.pattern.permute.xlu0 0
    %37 = vperm.xlu0 %36, %v28
    %v38 = vpop.permute.xlu0 %37
    %v40 = vlaneseq
    %v41 = vshrl.u32 %v40, 7
    %v42 = vsub.s32 0, %v41
    %v43 = vrot.slane %v26, %v42
    %v44 = vmul.f32 %v33, %v43
    %v45 = vmul.f32 %v38, %v43
    %46 = vset.pattern.permute.xlu0 1
    %47 = vperm.xlu0 %46, %v27
    %v48 = vpop.permute.xlu0 %47
    %50 = vset.pattern.permute.xlu0 1
    %51 = vperm.xlu0 %50, %v28
    %v52 = vpop.permute.xlu0 %51
    %v54 = vlaneseq
    %v55 = vshrl.u32 %v54, 7
    %v56 = vsub.s32 1, %v55
    %v57 = vrot.slane %v26, %v56
    %v58 = vmul.f32 %v48, %v57
    %v59 = vmul.f32 %v52, %v57
    %v60 = vadd.f32 %v44, %v58
    %v61 = vadd.f32 %v45, %v59
    %62 = vset.pattern.permute.xlu0 2
    %63 = vperm.xlu0 %62, %v27
    %v64 = vpop.permute.xlu0 %63
    %66 = vset.pattern.permute.xlu0 2
    %67 = vperm.xlu0 %66, %v28
    %v68 = vpop.permute.xlu0 %67
    %v70 = vlaneseq
    %v71 = vshrl.u32 %v70, 7
    %v72 = vsub.s32 2, %v71
    %v73 = vrot.slane %v26, %v72
    %v74 = vmul.f32 %v64, %v73
    %v75 = vmul.f32 %v68, %v73
    %v76 = vadd.f32 %v60, %v74
    %v77 = vadd.f32 %v61, %v75
    %78 = vset.pattern.permute.xlu0 3
    %79 = vperm.xlu0 %78, %v27
    %v80 = vpop.permute.xlu0 %79
    %82 = vset.pattern.permute.xlu0 3
    %83 = vperm.xlu0 %82, %v28
    %v84 = vpop.permute.xlu0 %83
    %v86 = vlaneseq
    %v87 = vshrl.u32 %v86, 7
    %v88 = vsub.s32 3, %v87
    %v89 = vrot.slane %v26, %v88
    %v90 = vmul.f32 %v80, %v89
    %v91 = vmul.f32 %v84, %v89
    %v92 = vadd.f32 %v76, %v90
    %v93 = vadd.f32 %v77, %v91
    %94 = vset.pattern.permute.xlu0 4
    %95 = vperm.xlu0 %94, %v27
    %v96 = vpop.permute.xlu0 %95
    %98 = vset.pattern.permute.xlu0 4
    %99 = vperm.xlu0 %98, %v28
    %v100 = vpop.permute.xlu0 %99
    %v102 = vadd.f32 %v92, %v96
    %v103 = vadd.f32 %v93, %v100
    %v104 = vmax.f32 %v102, 0.0
    %v105 = vmax.f32 %v103, 0.0
    %107 = vset.pattern.permute.xlu0 0
    %108 = vperm.xlu0 %107, %v29
    %v109 = vpop.permute.xlu0 %108
    %v111 = vlaneseq
    %v112 = vshrl.u32 %v111, 7
    %v113 = vsub.s32 0, %v112
    %v114 = vrot.slane %v104, %v113
    %v115 = vmul.f32 %v109, %v114
    %116 = vset.pattern.permute.xlu0 1
    %117 = vperm.xlu0 %116, %v29
    %v118 = vpop.permute.xlu0 %117
    %v120 = vlaneseq
    %v121 = vshrl.u32 %v120, 7
    %v122 = vsub.s32 1, %v121
    %v123 = vrot.slane %v104, %v122
    %v124 = vmul.f32 %v118, %v123
    %v125 = vadd.f32 %v115, %v124
    %126 = vset.pattern.permute.xlu0 2
    %127 = vperm.xlu0 %126, %v29
    %v128 = vpop.permute.xlu0 %127
    %v130 = vlaneseq
    %v131 = vshrl.u32 %v130, 7
    %v132 = vsub.s32 2, %v131
    %v133 = vrot.slane %v104, %v132
    %v134 = vmul.f32 %v128, %v133
    %v135 = vadd.f32 %v125, %v134
    %136 = vset.pattern.permute.xlu0 3
    %137 = vperm.xlu0 %136, %v29
    %v138 = vpop.permute.xlu0 %137
    %v140 = vlaneseq
    %v141 = vshrl.u32 %v140, 7
    %v142 = vsub.s32 3, %v141
    %v143 = vrot.slane %v104, %v142
    %v144 = vmul.f32 %v138, %v143
    %v145 = vadd.f32 %v135, %v144
    %146 = vset.pattern.permute.xlu0 4
    %147 = vperm.xlu0 %146, %v29
    %v148 = vpop.permute.xlu0 %147
    %v150 = vlaneseq
    %v151 = vshrl.u32 %v150, 7
    %v152 = vsub.s32 4, %v151
    %v153 = vrot.slane %v104, %v152
    %v154 = vmul.f32 %v148, %v153
    %v155 = vadd.f32 %v145, %v154
    %156 = vset.pattern.permute.xlu0 5
    %157 = vperm.xlu0 %156, %v29
    %v158 = vpop.permute.xlu0 %157
    %v160 = vlaneseq
    %v161 = vshrl.u32 %v160, 7
    %v162 = vsub.s32 5, %v161
    %v163 = vrot.slane %v104, %v162
    %v164 = vmul.f32 %v158, %v163
    %v165 = vadd.f32 %v155, %v164
    %166 = vset.pattern.permute.xlu0 6
    %167 = vperm.xlu0 %166, %v29
    %v168 = vpop.permute.xlu0 %167
    %v170 = vlaneseq
    %v171 = vshrl.u32 %v170, 7
    %v172 = vsub.s32 6, %v171
    %v173 = vrot.slane %v104, %v172
    %v174 = vmul.f32 %v168, %v173
    %v175 = vadd.f32 %v165, %v174
    %176 = vset.pattern.permute.xlu0 7
    %177 = vperm.xlu0 %176, %v29
    %v178 = vpop.permute.xlu0 %177
    %v180 = vlaneseq
    %v181 = vshrl.u32 %v180, 7
    %v182 = vsub.s32 7, %v181
    %v183 = vrot.slane %v104, %v182
    %v184 = vmul.f32 %v178, %v183
    %v185 = vadd.f32 %v175, %v184
    %186 = vset.pattern.permute.xlu0 8
    %187 = vperm.xlu0 %186, %v29
    %v188 = vpop.permute.xlu0 %187
    %v190 = vlaneseq
    %v191 = vshrl.u32 %v190, 7
    %v192 = vsub.s32 0, %v191
    %v193 = vrot.slane %v105, %v192
    %v194 = vmul.f32 %v188, %v193
    %v195 = vadd.f32 %v185, %v194
    %196 = vset.pattern.permute.xlu0 9
    %197 = vperm.xlu0 %196, %v29
    %v198 = vpop.permute.xlu0 %197
    %v200 = vlaneseq
    %v201 = vshrl.u32 %v200, 7
    %v202 = vsub.s32 1, %v201
    %v203 = vrot.slane %v105, %v202
    %v204 = vmul.f32 %v198, %v203
    %v205 = vadd.f32 %v195, %v204
    %206 = vset.pattern.permute.xlu0 10
    %207 = vperm.xlu0 %206, %v29
    %v208 = vpop.permute.xlu0 %207
    %v210 = vlaneseq
    %v211 = vshrl.u32 %v210, 7
    %v212 = vsub.s32 2, %v211
    %v213 = vrot.slane %v105, %v212
    %v214 = vmul.f32 %v208, %v213
    %v215 = vadd.f32 %v205, %v214
    %216 = vset.pattern.permute.xlu0 11
    %217 = vperm.xlu0 %216, %v29
    %v218 = vpop.permute.xlu0 %217
    %v220 = vlaneseq
    %v221 = vshrl.u32 %v220, 7
    %v222 = vsub.s32 3, %v221
    %v223 = vrot.slane %v105, %v222
    %v224 = vmul.f32 %v218, %v223
    %v225 = vadd.f32 %v215, %v224
    %226 = vset.pattern.permute.xlu0 12
    %227 = vperm.xlu0 %226, %v29
    %v228 = vpop.permute.xlu0 %227
    %v230 = vlaneseq
    %v231 = vshrl.u32 %v230, 7
    %v232 = vsub.s32 4, %v231
    %v233 = vrot.slane %v105, %v232
    %v234 = vmul.f32 %v228, %v233
    %v235 = vadd.f32 %v225, %v234
    %236 = vset.pattern.permute.xlu0 13
    %237 = vperm.xlu0 %236, %v29
    %v238 = vpop.permute.xlu0 %237
    %v240 = vlaneseq
    %v241 = vshrl.u32 %v240, 7
    %v242 = vsub.s32 5, %v241
    %v243 = vrot.slane %v105, %v242
    %v244 = vmul.f32 %v238, %v243
    %v245 = vadd.f32 %v235, %v244
    %246 = vset.pattern.permute.xlu0 14
    %247 = vperm.xlu0 %246, %v29
    %v248 = vpop.permute.xlu0 %247
    %v250 = vlaneseq
    %v251 = vshrl.u32 %v250, 7
    %v252 = vsub.s32 6, %v251
    %v253 = vrot.slane %v105, %v252
    %v254 = vmul.f32 %v248, %v253
    %v255 = vadd.f32 %v245, %v254
    %256 = vset.pattern.permute.xlu0 15
    %257 = vperm.xlu0 %256, %v29
    %v258 = vpop.permute.xlu0 %257
    %v260 = vlaneseq
    %v261 = vshrl.u32 %v260, 7
    %v262 = vsub.s32 7, %v261
    %v263 = vrot.slane %v105, %v262
    %v264 = vmul.f32 %v258, %v263
    %v265 = vadd.f32 %v255, %v264
    %266 = vset.pattern.permute.xlu0 16
    %267 = vperm.xlu0 %266, %v29
    %v268 = vpop.permute.xlu0 %267
    %v270 = vadd.f32 %v265, %v268
    %vm271 = vcmask 1041408
    %v272 = vsel %vm271, %v270, -inf
    %v273 = vrot.slane %v272, 4
    %v274 = vmax.f32 %v272, %v273
    %v275 = vrot.slane %v274, 2
    %v276 = vmax.f32 %v274, %v275
    %v277 = vrot.slane %v276, 1
    %v278 = vmax.f32 %v276, %v277
    %v279 = vsub.f32 %v270, %v278
    %v280 = vmul.f32 %v279, 1.442695
    %v281 = vpow.pop %v280
    %v282 = vsel %vm271, %v281, 0.0
    %v283 = vrot.slane %v282, 4
    %v284 = vadd.f32 %v282, %v283
    %v285 = vrot.slane %v284, 2
    %v286 = vadd.f32 %v284, %v285
    %v287 = vrot.slane %v286, 1
    %v288 = vadd.f32 %v286, %v287
    %v289 = vrcp.pop %v288
    %v290 = vmul.f32 %v288, %v289
    %v291 = vsub.f32 2.0, %v290
    %v292 = vmul.f32 %v289, %v291
    %v293 = vmul.f32 %v281, %v292
    %294 = vst [vmem:[#allocation5] sm:$0x3] %v293
    // Predicated region
    $region14: #{policy_forward_fm.1} parent=1 // pred_check
      _
    $region15: #{policy_forward_fm.1} parent=1 // pred_check_branch
      %296 = sbr.rel (0) target = $region17
    $region16: #{policy_forward_fm.1} parent=1 // pred_region
      %s298 = ssub.s32 32, 32
      %299 = vsyncadd [#allocation4], %s298
      %s301 = sshll.u32 [#allocation5], 4
      %s302 = int_to_ptr.vmem [resolvable:$true] %s301
      %304 = dma.vmem_to_hbm [thread:$0]  %s302, 32, %s2, [#allocation4]
    $region17: #{policy_forward_fm.1} parent=1 // pred_fallthru
      _
    // Predicated region
    $region18: #{policy_forward_fm.1} parent=1 // pred_check
      _
    $region19: #{policy_forward_fm.1} parent=1 // pred_check_branch
      %306 = sbr.rel (0) target = $region21
    $region20: #{policy_forward_fm.1} parent=1 // pred_region
      %307 = dma.done [#allocation4], 32
    $region21: #{policy_forward_fm.1} parent=1 // pred_fallthru
      _
    %308 = vsyncpa [#allocation3], 1
    %309 = vsyncpa [#allocation4], 1

</llo_original>
